<compile_context>
chip_gen: v6e
topology: v6e:2x2x1
jax: 0.10.0
libtpu: 0.0.40
codegen_flags: <defaults>
</compile_context>

<pallas_src>
import jax
import jax.numpy as jnp
from jax import lax
from jax.experimental import pallas as pl
from jax.experimental.pallas import tpu as pltpu

MARGIN = 0.3
_BIG = 1e30   # finite sentinel instead of +/-inf (safe for TPU reductions)
_LANE = 128


def _round_up(x: int, m: int) -> int:
    return ((x + m - 1) // m) * m


def _chip_config():
    """Per-generation planning knobs derived from the attached device."""
    kind = ""
    try:
        kind = jax.devices()[0].device_kind.lower()
    except Exception:
        pass
    # Unknown chip: conservative defaults (assume small scoped VMEM, 1 TC).
    cfg = dict(min_tile=128, plan_budget=24 << 20, vmem_limit=48 << 20, num_tc=1)
    if ("v5 lite" in kind) or ("v5e" in kind) or ("v5lite" in kind):
        cfg.update(min_tile=128, plan_budget=80 << 20, vmem_limit=96 << 20, num_tc=1)
    elif "v6" in kind:
        cfg.update(min_tile=256, plan_budget=80 << 20, vmem_limit=96 << 20, num_tc=1)
    elif "v7" in kind:
        cfg.update(min_tile=256, plan_budget=36 << 20, vmem_limit=44 << 20, num_tc=2)
    elif ("v4" in kind) or ("v5" in kind):
        cfg.update(min_tile=128, plan_budget=80 << 20, vmem_limit=96 << 20, num_tc=2)
    return cfg


def _choose_tile(n: int, d_pad: int, itemsize: int, plan_budget: int, min_tile: int) -> int:
    """Largest 128-multiple tile whose working set fits the planning budget.

    The tile is chosen first; n is padded up to a multiple of it afterwards
    (tile-then-pad), so e.g. n=300 becomes one 384-wide tile instead of a 3x3
    grid of 128s.
    """
    n128 = _round_up(max(n, 1), _LANE)
    cands = sorted({min(t, n128) for t in (512, 384, 256, 128)}, reverse=True)

    def fits(t):
        slabs = 2 * 2 * t * d_pad * itemsize      # row + col x slabs, double-buffered
        temps = 4 * t * t * 4                     # gram / s / masked copies (f32)
        scratch = 2 * t * _LANE * 4               # lane-dense running accumulators
        return slabs + temps + scratch <= plan_budget

    for t in cands:
        if fits(t) and (t >= min_tile or t == n128):
            return t
    # TODO(synk): stream d in chunks (extra reduction grid axis + VMEM gram accumulator)
    # when even a 128-wide tile with full-d slabs exceeds the VMEM budget (matters on v7x).
    return cands[-1]


def _kernel(xr_ref, xc_ref, nch_ref, lr_ref, lc_ref, sp_ref, sn_ref, pos_acc, neg_acc):
    j = pl.program_id(1)          # column-tile (reduction) axis, last grid axis

    @pl.when(j == 0)
    def _init():
        pos_acc[...] = jnp.full_like(pos_acc, -_BIG)
        neg_acc[...] = jnp.full_like(neg_acc, _BIG)

    # Gram tile on the MXU, contracting the feature dims directly (no transposed copy);
    # operands stay in their native dtype, f32 accumulation.
    gram = lax.dot_general(
        xr_ref[...], xc_ref[...],
        dimension_numbers=(((1,), (1,)), ((), ())),
        preferred_element_type=jnp.float32,
    )                                                   # (tm, tn)

    # s_ij = 0.5*||x_j||^2 - <x_i, x_j>;  dist2_ij = ||x_i||^2 + 2*s_ij.
    # Row-norm add, 2x mul, clamp and sqrt are hoisted to the wrapper (monotone, so
    # the per-row arg-extrema are unchanged).  Padded columns carry a +_BIG half-norm
    # and a sentinel label, so no explicit padding mask is needed here.
    s = nch_ref[...] - gram                             # (1,tn) - (tm,tn)
    same = lr_ref[...] == lc_ref[...]                   # (tm,1) == (1,tn) -> (tm,tn)

    pos = jnp.where(same, s, -_BIG)
    neg = jnp.where(same, _BIG, s)

    # Lane-dense running extrema: elementwise max/min over 128-wide, vreg-aligned
    # column chunks into (tm,128) accumulators — pure VPU work, no per-step XLU reduce
    # and no narrow (tm,1) read-modify-write.
    pa = pos_acc[...]
    na = neg_acc[...]
    tn = pos.shape[1]
    for c in range(tn // _LANE):
        sl = slice(c * _LANE, (c + 1) * _LANE)
        pa = jnp.maximum(pa, pos[:, sl])
        na = jnp.minimum(na, neg[:, sl])
    pos_acc[...] = pa
    neg_acc[...] = na

    # One 128->1 cross-lane reduce + narrow store per row tile.
    @pl.when(j == pl.num_programs(1) - 1)
    def _flush():
        sp_ref[...] = jnp.max(pos_acc[...], axis=1, keepdims=True)
        sn_ref[...] = jnp.min(neg_acc[...], axis=1, keepdims=True)


def triplet_loss(inputs, targets, margin=MARGIN):
    """inputs: (n, d) float features; targets: (n,) int labels. Returns (loss, prec)."""
    n, d = inputs.shape
    cfg = _chip_config()

    d_pad = _round_up(max(d, _LANE), _LANE)
    tile = _choose_tile(n, d_pad, inputs.dtype.itemsize,
                        cfg["plan_budget"], cfg["min_tile"])
    n_pad = _round_up(n, tile)

    tn = tile
    tm = tile
    # On 2-TC chips (v7x/v4/v5p) the row axis is the only "parallel" axis; split it so
    # the second TensorCore isn't idle when there would otherwise be a single row tile.
    if cfg["num_tc"] >= 2 and (n_pad // tm) < 2 and tm >= 256:
        tm = tm // 2

    x = inputs
    if d_pad != d:
        x = jnp.pad(x, ((0, 0), (0, d_pad - d)))
    if n_pad != n:
        x = jnp.pad(x, ((0, n_pad - n), (0, 0)))

    # Padded labels use a sentinel no real id can match -> padded columns are never
    # "positive"; their +_BIG half-norm keeps them from ever winning the negative min.
    sentinel = jnp.iinfo(jnp.int32).min
    labels = targets.astype(jnp.int32)
    if n_pad != n:
        labels = jnp.pad(labels, (0, n_pad - n), constant_values=sentinel)

    xf = x.astype(jnp.float32)
    sq = jnp.sum(xf * xf, axis=1)                    # (n_pad,) squared norms (lane-dense)
    col_half = 0.5 * sq
    if n_pad != n:
        col_half = jnp.where(jnp.arange(n_pad) < n, col_half, _BIG)

    col_half = col_half.reshape(1, n_pad)
    lab_col = labels.reshape(n_pad, 1)
    lab_row = labels.reshape(1, n_pad)

    grid = (n_pad // tm, n_pad // tn)

    sp, sn = pl.pallas_call(
        _kernel,
        out_shape=(
            jax.ShapeDtypeStruct((n_pad, 1), jnp.float32),
            jax.ShapeDtypeStruct((n_pad, 1), jnp.float32),
        ),
        grid=grid,
        in_specs=[
            pl.BlockSpec((tm, d_pad), lambda i, j: (i, 0)),   # row tile of x
            pl.BlockSpec((tn, d_pad), lambda i, j: (j, 0)),   # col tile of x
            pl.BlockSpec((1, tn), lambda i, j: (0, j)),       # 0.5 * col squared norms
            pl.BlockSpec((tm, 1), lambda i, j: (i, 0)),       # row labels
            pl.BlockSpec((1, tn), lambda i, j: (0, j)),       # col labels
        ],
        out_specs=(
            pl.BlockSpec((tm, 1), lambda i, j: (i, 0)),
            pl.BlockSpec((tm, 1), lambda i, j: (i, 0)),
        ),
        scratch_shapes=[
            pltpu.VMEM((tm, _LANE), jnp.float32),             # pos-max accumulator
            pltpu.VMEM((tm, _LANE), jnp.float32),             # neg-min accumulator
        ],
        compiler_params=pltpu.CompilerParams(
            dimension_semantics=("parallel", "arbitrary"),
            vmem_limit_bytes=cfg["vmem_limit"],
        ),
    )(x, x, col_half, lab_col, lab_row)

    # Recover squared distances of the selected extrema, then clamp + sqrt on (n,) only.
    sq_v = sq[:n]
    ap2 = sq_v + 2.0 * sp[:n, 0]
    an2 = sq_v + 2.0 * sn[:n, 0]
    dist_ap = jnp.sqrt(jnp.maximum(ap2, 1e-12))
    dist_an = jnp.sqrt(jnp.maximum(an2, 1e-12))

    # MarginRankingLoss with y=1: mean(max(0, margin - (dist_an - dist_ap)))
    loss = jnp.mean(jnp.maximum(dist_ap - dist_an + margin, 0.0))
    prec = jnp.mean((dist_an > dist_ap).astype(jnp.float32))
    return loss, prec


def _reference(inputs, targets, margin=MARGIN):
    # pure-JAX reference mirroring the PyTorch forward
    x = inputs.astype(jnp.float32)
    sq = jnp.sum(x * x, axis=1, keepdims=True)
    dist = sq + sq.T - 2.0 * (x @ x.T)
    dist = jnp.sqrt(jnp.clip(dist, 1e-12))
    mask = targets[:, None] == targets[None, :]
    dist_ap = jnp.max(jnp.where(mask, dist, -jnp.inf), axis=1)
    dist_an = jnp.min(jnp.where(mask, jnp.inf, dist), axis=1)
    loss = jnp.mean(jnp.maximum(dist_ap - dist_an + margin, 0.0))
    prec = jnp.mean((dist_an > dist_ap).astype(jnp.float32))
    return loss, prec


if __name__ == "__main__":
    key = jax.random.PRNGKey(0)
    k1, k2 = jax.random.split(key)

    # Case 1: toy shape consistent with the module (n=8 samples, d=32 features).
    n, d = 8, 32
    inputs = jax.random.normal(k1, (n, d), dtype=jnp.float32)
    targets = jnp.array([0, 0, 1, 1, 2, 2, 3, 3], dtype=jnp.int32)  # 4 ids x 2 samples

    loss, prec = triplet_loss(inputs, targets)
    jax.block_until_ready((loss, prec))
    ref_loss, ref_prec = _reference(inputs, targets)
    assert jnp.allclose(loss, ref_loss, atol=1e-4, rtol=1e-4), (loss, ref_loss)
    assert jnp.allclose(prec, ref_prec, atol=1e-6), (prec, ref_prec)

    # Case 2: non-aligned shape exercising padding + tile-then-pad + online reduction.
    n2, d2 = 300, 48
    inputs2 = jax.random.normal(k2, (n2, d2), dtype=jnp.float32)
    targets2 = (jnp.arange(n2) % 7).astype(jnp.int32)

    loss2, prec2 = triplet_loss(inputs2, targets2)
    jax.block_until_ready((loss2, prec2))
    ref_loss2, ref_prec2 = _reference(inputs2, targets2)
    assert jnp.allclose(loss2, ref_loss2, atol=1e-3, rtol=1e-3), (loss2, ref_loss2)
    # allow at most ~1 flipped comparison out of 300 due to fp rounding near ties
    assert jnp.allclose(prec2, ref_prec2, atol=5e-3), (prec2, ref_prec2)

    print("KERNEL_OK")
</pallas_src>

<mosaic_0001>
module attributes {stable_mosaic.version = 11 : i64} {
  func.func @_kernel(%arg0: i32, %arg1: i32, %arg2: memref<128x128xf32, #tpu.memory_space<vmem>>, %arg3: memref<128x128xf32, #tpu.memory_space<vmem>>, %arg4: memref<1x128xf32, #tpu.memory_space<vmem>>, %arg5: memref<128x1xi32, #tpu.memory_space<vmem>>, %arg6: memref<1x128xi32, #tpu.memory_space<vmem>>, %arg7: memref<128x1xf32, #tpu.memory_space<vmem>>, %arg8: memref<128x1xf32, #tpu.memory_space<vmem>>, %arg9: memref<128x128xf32, #tpu.memory_space<vmem>>, %arg10: memref<128x128xf32, #tpu.memory_space<vmem>>) attributes {dimension_semantics = [#tpu.dimension_semantics<parallel>, #tpu.dimension_semantics<arbitrary>], iteration_bounds = array<i64: 1, 1>, scalar_prefetch = 0 : i64, scratch_operands = 2 : i64, tpu.core_type = #tpu.core_type<tc>, window_params = [{transform_indices = @transform_0, window_bounds = array<i64: 128, 128>}, {transform_indices = @transform_1, window_bounds = array<i64: 128, 128>}, {transform_indices = @transform_2, window_bounds = array<i64: 1, 128>}, {transform_indices = @transform_3, window_bounds = array<i64: 128, 1>}, {transform_indices = @transform_4, window_bounds = array<i64: 1, 128>}, {transform_indices = @transform_5, window_bounds = array<i64: 128, 1>}, {transform_indices = @transform_6, window_bounds = array<i64: 128, 1>}]} {
    %c0_i32 = arith.constant 0 : i32
    %0 = arith.cmpi eq, %arg1, %c0_i32 : i32
    %1 = arith.extui %0 : i1 to i32
    %c0_i32_0 = arith.constant 0 : i32
    %2 = arith.cmpi ne, %1, %c0_i32_0 : i32
    scf.if %2 {
      %cst_22 = arith.constant -1.000000e+30 : f32
      %27 = vector.broadcast %cst_22 : f32 to vector<128x128xf32>
      %c0_23 = arith.constant 0 : index
      %c0_24 = arith.constant 0 : index
      %28 = vector.load %arg9[%c0_23, %c0_24] : memref<128x128xf32, #tpu.memory_space<vmem>>, vector<128x128xf32>
      tpu.vector_store %arg9[%c0_23, %c0_24], %27 {strides = array<i32>} : memref<128x128xf32, #tpu.memory_space<vmem>>, vector<128x128xf32>,
      %cst_25 = arith.constant 1.000000e+30 : f32
      %29 = vector.broadcast %cst_25 : f32 to vector<128x128xf32>
      %c0_26 = arith.constant 0 : index
      %c0_27 = arith.constant 0 : index
      %30 = vector.load %arg10[%c0_26, %c0_27] : memref<128x128xf32, #tpu.memory_space<vmem>>, vector<128x128xf32>
      tpu.vector_store %arg10[%c0_26, %c0_27], %29 {strides = array<i32>} : memref<128x128xf32, #tpu.memory_space<vmem>>, vector<128x128xf32>,
    } else {
    }
    %c0 = arith.constant 0 : index
    %c0_1 = arith.constant 0 : index
    %3 = vector.load %arg2[%c0, %c0_1] : memref<128x128xf32, #tpu.memory_space<vmem>>, vector<128x128xf32>
    %c0_2 = arith.constant 0 : index
    %c0_3 = arith.constant 0 : index
    %4 = vector.load %arg3[%c0_2, %c0_3] : memref<128x128xf32, #tpu.memory_space<vmem>>, vector<128x128xf32>
    %cst = arith.constant dense<0.000000e+00> : vector<128x128xf32>
    %5 = tpu.matmul %3, %4, %cst {dimension_numbers = #tpu.dot_dimension_numbers<[1], [1], [0], [0], [0, 0, 1, 0], [], []>} : vector<128x128xf32>, vector<128x128xf32>, vector<128x128xf32> -> vector<128x128xf32>
    %c0_4 = arith.constant 0 : index
    %c0_5 = arith.constant 0 : index
    %6 = vector.load %arg4[%c0_4, %c0_5] : memref<1x128xf32, #tpu.memory_space<vmem>>, vector<1x128xf32>
    %7 = vector.broadcast %6 : vector<1x128xf32> to vector<128x128xf32>
    %8 = arith.subf %7, %5 : vector<128x128xf32>
    %c0_6 = arith.constant 0 : index
    %c0_7 = arith.constant 0 : index
    %9 = vector.load %arg5[%c0_6, %c0_7] : memref<128x1xi32, #tpu.memory_space<vmem>>, vector<128x1xi32>
    %c0_8 = arith.constant 0 : index
    %c0_9 = arith.constant 0 : index
    %10 = vector.load %arg6[%c0_8, %c0_9] : memref<1x128xi32, #tpu.memory_space<vmem>>, vector<1x128xi32>
    %11 = vector.broadcast %9 : vector<128x1xi32> to vector<128x128xi32>
    %12 = vector.broadcast %10 : vector<1x128xi32> to vector<128x128xi32>
    %13 = arith.cmpi eq, %11, %12 : vector<128x128xi32>
    %cst_10 = arith.constant -1.000000e+30 : f32
    %14 = vector.broadcast %cst_10 : f32 to vector<128x128xf32>
    %15 = arith.select %13, %8, %14 : vector<128x128xi1>, vector<128x128xf32>
    %cst_11 = arith.constant 1.000000e+30 : f32
    %16 = vector.broadcast %cst_11 : f32 to vector<128x128xf32>
    %17 = arith.select %13, %16, %8 : vector<128x128xi1>, vector<128x128xf32>
    %c0_12 = arith.constant 0 : index
    %c0_13 = arith.constant 0 : index
    %18 = vector.load %arg9[%c0_12, %c0_13] : memref<128x128xf32, #tpu.memory_space<vmem>>, vector<128x128xf32>
    %c0_14 = arith.constant 0 : index
    %c0_15 = arith.constant 0 : index
    %19 = vector.load %arg10[%c0_14, %c0_15] : memref<128x128xf32, #tpu.memory_space<vmem>>, vector<128x128xf32>
    %20 = arith.maximumf %18, %15 : vector<128x128xf32>
    %21 = arith.minimumf %19, %17 : vector<128x128xf32>
    %c0_16 = arith.constant 0 : index
    %c0_17 = arith.constant 0 : index
    %22 = vector.load %arg9[%c0_16, %c0_17] : memref<128x128xf32, #tpu.memory_space<vmem>>, vector<128x128xf32>
    tpu.vector_store %arg9[%c0_16, %c0_17], %20 {strides = array<i32>} : memref<128x128xf32, #tpu.memory_space<vmem>>, vector<128x128xf32>,
    %c0_18 = arith.constant 0 : index
    %c0_19 = arith.constant 0 : index
    %23 = vector.load %arg10[%c0_18, %c0_19] : memref<128x128xf32, #tpu.memory_space<vmem>>, vector<128x128xf32>
    tpu.vector_store %arg10[%c0_18, %c0_19], %21 {strides = array<i32>} : memref<128x128xf32, #tpu.memory_space<vmem>>, vector<128x128xf32>,
    %c0_i32_20 = arith.constant 0 : i32
    %24 = arith.cmpi eq, %arg1, %c0_i32_20 : i32
    %25 = arith.extui %24 : i1 to i32
    %c0_i32_21 = arith.constant 0 : i32
    %26 = arith.cmpi ne, %25, %c0_i32_21 : i32
    scf.if %26 {
      %c0_22 = arith.constant 0 : index
      %c0_23 = arith.constant 0 : index
      %27 = vector.load %arg9[%c0_22, %c0_23] : memref<128x128xf32, #tpu.memory_space<vmem>>, vector<128x128xf32>
      %cst_24 = arith.constant dense<0xFF800000> : vector<128xf32>
      %28 = vector.multi_reduction <maximumf>, %27, %cst_24 [1] : vector<128x128xf32> to vector<128xf32>
      %29 = vector.shape_cast %28 : vector<128xf32> to vector<128x1xf32>
      %c0_25 = arith.constant 0 : index
      %c0_26 = arith.constant 0 : index
      %30 = vector.load %arg7[%c0_25, %c0_26] : memref<128x1xf32, #tpu.memory_space<vmem>>, vector<128x1xf32>
      tpu.vector_store %arg7[%c0_25, %c0_26], %29 {strides = array<i32>} : memref<128x1xf32, #tpu.memory_space<vmem>>, vector<128x1xf32>,
      %c0_27 = arith.constant 0 : index
      %c0_28 = arith.constant 0 : index
      %31 = vector.load %arg10[%c0_27, %c0_28] : memref<128x128xf32, #tpu.memory_space<vmem>>, vector<128x128xf32>
      %cst_29 = arith.constant dense<0x7F800000> : vector<128xf32>
      %32 = vector.multi_reduction <minimumf>, %31, %cst_29 [1] : vector<128x128xf32> to vector<128xf32>
      %33 = vector.shape_cast %32 : vector<128xf32> to vector<128x1xf32>
      %c0_30 = arith.constant 0 : index
      %c0_31 = arith.constant 0 : index
      %34 = vector.load %arg8[%c0_30, %c0_31] : memref<128x1xf32, #tpu.memory_space<vmem>>, vector<128x1xf32>
      tpu.vector_store %arg8[%c0_30, %c0_31], %33 {strides = array<i32>} : memref<128x1xf32, #tpu.memory_space<vmem>>, vector<128x1xf32>,
    } else {
    }
    return
  }
  func.func @transform_0(%arg0: i32, %arg1: i32) -> (i32, i32) {
    %c0_i32 = arith.constant 0 : i32
    %c0_i32_0 = arith.constant 0 : i32
    return %arg0, %c0_i32 : i32, i32
  }
  func.func @transform_1(%arg0: i32, %arg1: i32) -> (i32, i32) {
    %c0_i32 = arith.constant 0 : i32
    %c0_i32_0 = arith.constant 0 : i32
    return %arg1, %c0_i32 : i32, i32
  }
  func.func @transform_2(%arg0: i32, %arg1: i32) -> (i32, i32) {
    %c0_i32 = arith.constant 0 : i32
    %c0_i32_0 = arith.constant 0 : i32
    return %c0_i32, %arg1 : i32, i32
  }
  func.func @transform_3(%arg0: i32, %arg1: i32) -> (i32, i32) {
    %c0_i32 = arith.constant 0 : i32
    %c0_i32_0 = arith.constant 0 : i32
    return %arg0, %c0_i32 : i32, i32
  }
  func.func @transform_4(%arg0: i32, %arg1: i32) -> (i32, i32) {
    %c0_i32 = arith.constant 0 : i32
    %c0_i32_0 = arith.constant 0 : i32
    return %c0_i32, %arg1 : i32, i32
  }
  func.func @transform_5(%arg0: i32, %arg1: i32) -> (i32, i32) {
    %c0_i32 = arith.constant 0 : i32
    %c0_i32_0 = arith.constant 0 : i32
    return %arg0, %c0_i32 : i32, i32
  }
  func.func @transform_6(%arg0: i32, %arg1: i32) -> (i32, i32) {
    %c0_i32 = arith.constant 0 : i32
    %c0_i32_0 = arith.constant 0 : i32
    return %arg0, %c0_i32 : i32, i32
  }
}

</mosaic_0001>

<llo_original>
// kernel: tpu_custom_call.1
$region0: #{tpu_custom_call.1}
  #allocation0 [shape = 'u32[]', space=smem, size = 0x4, offset = 0x4, fixed_abs, tag = 'smem constant byte address 0x4 - core index']
  #allocation1 [shape = 'u32[144,128]{1,0:T(1,128)}', space=vmem, size = 0x12000, scoped, tag = 'internal scratch']
  #allocation2 [shape = 'f32[128,128]{1,0:T(8,128)}', space=vmem, size = 0x10000, scoped, tag = 'scratch operand']
  #allocation3 [shape = 'f32[128,128]{1,0:T(8,128)}', space=vmem, size = 0x10000, scoped, tag = 'scratch operand']
  %s0 = inlined_call_operand.vmem [shape: f32[128,128], index: 0, kind: input, shape index: {}]
  %s1 = inlined_call_operand.hbm [shape: f32[128,128], index: 1, kind: input, shape index: {}]
  %s2 = inlined_call_operand.vmem [shape: f32[1,128], index: 2, kind: input, shape index: {}]
  %s3 = inlined_call_operand.vmem [shape: s32[128,1], index: 3, kind: input, shape index: {}]
  %s4 = inlined_call_operand.vmem [shape: s32[1,128], index: 4, kind: input, shape index: {}]
  %s5 = inlined_call_operand.vmem [shape: f32[128,1], index: 5, kind: output, shape index: {0}]
  %s6 = inlined_call_operand.vmem [shape: f32[128,1], index: 6, kind: output, shape index: {1}]
  %7 = xla_tuple %s5, %s6
  %s8 = sld [smem:[#allocation0]]
  $region50: #{tpu_custom_call.1} parent=0
    _
  %s10 = ssub.s32 1, %s8
  %s11 = scalar_select 0, %s10, %s8
  $region1: #{tpu_custom_call.1} parent=0
    #allocation4 [shape = 'u8[65536]{0}', space=vmem, size = 0x10000, scoped, tag = 'input window, operand 1, single buffered']
    #allocation5 [shape = 's32[1]{0}', space=sflag, size = 0x4, scoped, tag = 'scoped memory for tpu_custom_call.1']
    %12 = vsyncpa [#allocation5], 0
    // Predicated region
    $region2: #{tpu_custom_call.1} parent=1 // pred_check
      _
    $region3: #{tpu_custom_call.1} parent=1 // pred_check_branch
      %14 = sbr.rel (0) target = $region5
    $region4: #{tpu_custom_call.1} parent=1 // pred_region
      _
    $region5: #{tpu_custom_call.1} parent=1 // pred_fallthru
      _
    // Predicated region
    $region6: #{tpu_custom_call.1} parent=1 // pred_check
      _
    $region7: #{tpu_custom_call.1} parent=1 // pred_check_branch
      %16 = sbr.rel (0) target = $region9
    $region8: #{tpu_custom_call.1} parent=1 // pred_region
      %s18 = ssub.s32 2048, 2048
      %19 = vsyncadd [#allocation5], %s18
      %s20 = sshll.u32 [#allocation4], 4
      %s21 = int_to_ptr.vmem [resolvable:$true] %s20
      %26 = dma.hbm_to_vmem [thread:$0]  %s1, 2048, %s21, [#allocation5], 128, 128, 8
    $region9: #{tpu_custom_call.1} parent=1 // pred_fallthru
      _
    // Predicated region
    $region10: #{tpu_custom_call.1} parent=1 // pred_check
      _
    $region11: #{tpu_custom_call.1} parent=1 // pred_check_branch
      %28 = sbr.rel (0) target = $region13
    $region12: #{tpu_custom_call.1} parent=1 // pred_region
      _
    $region13: #{tpu_custom_call.1} parent=1 // pred_fallthru
      _
    // Predicated region
    $region14: #{tpu_custom_call.1} parent=1 // pred_check
      _
    $region15: #{tpu_custom_call.1} parent=1 // pred_check_branch
      %30 = sbr.rel (0) target = $region17
    $region16: #{tpu_custom_call.1} parent=1 // pred_region
      _
    $region17: #{tpu_custom_call.1} parent=1 // pred_fallthru
      _
    // Predicated region
    $region18: #{tpu_custom_call.1} parent=1 // pred_check
      _
    $region19: #{tpu_custom_call.1} parent=1 // pred_check_branch
      %32 = sbr.rel (0) target = $region21
    $region20: #{tpu_custom_call.1} parent=1 // pred_region
      _
    $region21: #{tpu_custom_call.1} parent=1 // pred_fallthru
      _
    // Predicated region
    $region22: #{tpu_custom_call.1} parent=1 // pred_check
      _
    $region23: #{tpu_custom_call.1} parent=1 // pred_check_branch
      %34 = sbr.rel (0) target = $region25
    $region24: #{tpu_custom_call.1} parent=1 // pred_region
      %35 = dma.done [#allocation5], 2048
    $region25: #{tpu_custom_call.1} parent=1 // pred_fallthru
      _
    %p36 = scmp.eq.s32.totalorder 0, 0
    // Predicated region
    $region26: #{tpu_custom_call.1} parent=1 // pred_check
      %p37 = pneg %p36
    $region27: #{tpu_custom_call.1} parent=1 // pred_check_branch
      %39 = sbr.rel (%p37) target = $region29
    $region28: #{tpu_custom_call.1} parent=1 // pred_region
      %40 = vst [vmem:[#allocation2] sm:$0xff] -1e+30
      %41 = vst [vmem:[#allocation2 + $0x8] sm:$0xff] -1e+30
      %42 = vst [vmem:[#allocation2 + $0x10] sm:$0xff] -1e+30
      %43 = vst [vmem:[#allocation2 + $0x18] sm:$0xff] -1e+30
      %44 = vst [vmem:[#allocation2 + $0x20] sm:$0xff] -1e+30
      %45 = vst [vmem:[#allocation2 + $0x28] sm:$0xff] -1e+30
      %46 = vst [vmem:[#allocation2 + $0x30] sm:$0xff] -1e+30
      %47 = vst [vmem:[#allocation2 + $0x38] sm:$0xff] -1e+30
      %48 = vst [vmem:[#allocation2 + $0x40] sm:$0xff] -1e+30
      %49 = vst [vmem:[#allocation2 + $0x48] sm:$0xff] -1e+30
      %50 = vst [vmem:[#allocation2 + $0x50] sm:$0xff] -1e+30
      %51 = vst [vmem:[#allocation2 + $0x58] sm:$0xff] -1e+30
      %52 = vst [vmem:[#allocation2 + $0x60] sm:$0xff] -1e+30
      %53 = vst [vmem:[#allocation2 + $0x68] sm:$0xff] -1e+30
      %54 = vst [vmem:[#allocation2 + $0x70] sm:$0xff] -1e+30
      %55 = vst [vmem:[#allocation2 + $0x78] sm:$0xff] -1e+30
      %56 = vst [vmem:[#allocation3] sm:$0xff] 1e+30
      %57 = vst [vmem:[#allocation3 + $0x8] sm:$0xff] 1e+30
      %58 = vst [vmem:[#allocation3 + $0x10] sm:$0xff] 1e+30
      %59 = vst [vmem:[#allocation3 + $0x18] sm:$0xff] 1e+30
      %60 = vst [vmem:[#allocation3 + $0x20] sm:$0xff] 1e+30
      %61 = vst [vmem:[#allocation3 + $0x28] sm:$0xff] 1e+30
      %62 = vst [vmem:[#allocation3 + $0x30] sm:$0xff] 1e+30
      %63 = vst [vmem:[#allocation3 + $0x38] sm:$0xff] 1e+30
      %64 = vst [vmem:[#allocation3 + $0x40] sm:$0xff] 1e+30
      %65 = vst [vmem:[#allocation3 + $0x48] sm:$0xff] 1e+30
      %66 = vst [vmem:[#allocation3 + $0x50] sm:$0xff] 1e+30
      %67 = vst [vmem:[#allocation3 + $0x58] sm:$0xff] 1e+30
      %68 = vst [vmem:[#allocation3 + $0x60] sm:$0xff] 1e+30
      %69 = vst [vmem:[#allocation3 + $0x68] sm:$0xff] 1e+30
      %70 = vst [vmem:[#allocation3 + $0x70] sm:$0xff] 1e+30
      %71 = vst [vmem:[#allocation3 + $0x78] sm:$0xff] 1e+30
    $region29: #{tpu_custom_call.1} parent=1 // pred_fallthru
      _
    %v72 = vld [vmem:[%s0] sm:$0xff]
    %v73 = vld [vmem:[%s0 + $0x8] sm:$0xff]
    %v74 = vld [vmem:[%s0 + $0x10] sm:$0xff]
    %v75 = vld [vmem:[%s0 + $0x18] sm:$0xff]
    %v76 = vld [vmem:[%s0 + $0x20] sm:$0xff]
    %v77 = vld [vmem:[%s0 + $0x28] sm:$0xff]
    %v78 = vld [vmem:[%s0 + $0x30] sm:$0xff]
    %v79 = vld [vmem:[%s0 + $0x38] sm:$0xff]
    %v80 = vld [vmem:[%s0 + $0x40] sm:$0xff]
    %v81 = vld [vmem:[%s0 + $0x48] sm:$0xff]
    %v82 = vld [vmem:[%s0 + $0x50] sm:$0xff]
    %v83 = vld [vmem:[%s0 + $0x58] sm:$0xff]
    %v84 = vld [vmem:[%s0 + $0x60] sm:$0xff]
    %v85 = vld [vmem:[%s0 + $0x68] sm:$0xff]
    %v86 = vld [vmem:[%s0 + $0x70] sm:$0xff]
    %v87 = vld [vmem:[%s0 + $0x78] sm:$0xff]
    %v88 = vld [vmem:[#allocation4] sm:$0xff]
    %v89 = vld [vmem:[#allocation4 + $0x8] sm:$0xff]
    %v90 = vld [vmem:[#allocation4 + $0x10] sm:$0xff]
    %v91 = vld [vmem:[#allocation4 + $0x18] sm:$0xff]
    %v92 = vld [vmem:[#allocation4 + $0x20] sm:$0xff]
    %v93 = vld [vmem:[#allocation4 + $0x28] sm:$0xff]
    %v94 = vld [vmem:[#allocation4 + $0x30] sm:$0xff]
    %v95 = vld [vmem:[#allocation4 + $0x38] sm:$0xff]
    %v96 = vld [vmem:[#allocation4 + $0x40] sm:$0xff]
    %v97 = vld [vmem:[#allocation4 + $0x48] sm:$0xff]
    %v98 = vld [vmem:[#allocation4 + $0x50] sm:$0xff]
    %v99 = vld [vmem:[#allocation4 + $0x58] sm:$0xff]
    %v100 = vld [vmem:[#allocation4 + $0x60] sm:$0xff]
    %v101 = vld [vmem:[#allocation4 + $0x68] sm:$0xff]
    %v102 = vld [vmem:[#allocation4 + $0x70] sm:$0xff]
    %v103 = vld [vmem:[#allocation4 + $0x78] sm:$0xff]
    %104 = vmatprep.subr.mxu0 0.0
    %105 = vmatpush1.xpose.msra.mxu0 %v103
    %106 = vmatprep.subr.mxu0 0.0
    %107 = vmatpush1.xpose.msra.mxu0 %v102
    %108 = vmatprep.subr.mxu0 0.0
    %109 = vmatpush1.xpose.msra.mxu0 %v101
    %110 = vmatprep.subr.mxu0 0.0
    %111 = vmatpush1.xpose.msra.mxu0 %v100
    %112 = vmatprep.subr.mxu0 0.0
    %113 = vmatpush1.xpose.msra.mxu0 %v99
    %114 = vmatprep.subr.mxu0 0.0
    %115 = vmatpush1.xpose.msra.mxu0 %v98
    %116 = vmatprep.subr.mxu0 0.0
    %117 = vmatpush1.xpose.msra.mxu0 %v97
    %118 = vmatprep.subr.mxu0 0.0
    %119 = vmatpush1.xpose.msra.mxu0 %v96
    %120 = vmatprep.subr.mxu0 0.0
    %121 = vmatpush1.xpose.msra.mxu0 %v95
    %122 = vmatprep.subr.mxu0 0.0
    %123 = vmatpush1.xpose.msra.mxu0 %v94
    %124 = vmatprep.subr.mxu0 0.0
    %125 = vmatpush1.xpose.msra.mxu0 %v93
    %126 = vmatprep.subr.mxu0 0.0
    %127 = vmatpush1.xpose.msra.mxu0 %v92
    %128 = vmatprep.subr.mxu0 0.0
    %129 = vmatpush1.xpose.msra.mxu0 %v91
    %130 = vmatprep.subr.mxu0 0.0
    %131 = vmatpush1.xpose.msra.mxu0 %v90
    %132 = vmatprep.subr.mxu0 0.0
    %133 = vmatpush1.xpose.msra.mxu0 %v89
    %134 = vmatprep.subr.mxu0 0.0
    %135 = vmatpush1.xpose.msra.mxu0 %v88
    %136 = vmatprep.subr.mxu0 0.0
    %137 = vmatpush2.xpose.msra.mxu0 0.0
    %138 = vmatprep.subr.mxu0 0.0
    %139 = vmatpush2.xpose.msra.mxu0 0.0
    %140 = vmatprep.subr.mxu0 0.0
    %141 = vmatpush2.xpose.msra.mxu0 0.0
    %142 = vmatprep.subr.mxu0 0.0
    %143 = vmatpush2.xpose.msra.mxu0 0.0
    %144 = vmatprep.subr.mxu0 0.0
    %145 = vmatpush2.xpose.msra.mxu0 0.0
    %146 = vmatprep.subr.mxu0 0.0
    %147 = vmatpush2.xpose.msra.mxu0 0.0
    %148 = vmatprep.subr.mxu0 0.0
    %149 = vmatpush2.xpose.msra.mxu0 0.0
    %150 = vmatprep.subr.mxu0 0.0
    %151 = vmatpush2.xpose.msra.mxu0 0.0
    %152 = vmatprep.subr.mxu0 0.0
    %153 = vmatpush2.xpose.msra.mxu0 0.0
    %154 = vmatprep.subr.mxu0 0.0
    %155 = vmatpush2.xpose.msra.mxu0 0.0
    %156 = vmatprep.subr.mxu0 0.0
    %157 = vmatpush2.xpose.msra.mxu0 0.0
    %158 = vmatprep.subr.mxu0 0.0
    %159 = vmatpush2.xpose.msra.mxu0 0.0
    %160 = vmatprep.subr.mxu0 0.0
    %161 = vmatpush2.xpose.msra.mxu0 0.0
    %162 = vmatprep.subr.mxu0 0.0
    %163 = vmatpush2.xpose.msra.mxu0 0.0
    %164 = vmatprep.subr.mxu0 0.0
    %165 = vmatpush2.xpose.msra.mxu0 0.0
    %166 = vmatprep.subr.mxu0 0.0
    %167 = vmatpush2.xpose.msra.mxu0 0.0
    %168 = vmatprep.mubr.f32.mxu0 0.0
    %169 = vmatmul.mubr.f32.gmra.mxu0 %v72
    %v170 = vpop.f32.mrf.mxu0
    %v171 = vadd.f32 0.0, %v170
    %v172 = vpop.f32.mrf.mxu0
    %173 = vmatprep.mubr.f32.mxu0 0.0
    %174 = vmatmul.mubr.f32.gmra.mxu0 %v73
    %v175 = vpop.f32.mrf.mxu0
    %v176 = vadd.f32 0.0, %v175
    %v177 = vpop.f32.mrf.mxu0
    %178 = vmatprep.mubr.f32.mxu0 0.0
    %179 = vmatmul.mubr.f32.gmra.mxu0 %v74
    %v180 = vpop.f32.mrf.mxu0
    %v181 = vadd.f32 0.0, %v180
    %v182 = vpop.f32.mrf.mxu0
    %183 = vmatprep.mubr.f32.mxu0 0.0
    %184 = vmatmul.mubr.f32.gmra.mxu0 %v75
    %v185 = vpop.f32.mrf.mxu0
    %v186 = vadd.f32 0.0, %v185
    %v187 = vpop.f32.mrf.mxu0
    %188 = vmatprep.mubr.f32.mxu0 0.0
    %189 = vmatmul.mubr.f32.gmra.mxu0 %v76
    %v190 = vpop.f32.mrf.mxu0
    %v191 = vadd.f32 0.0, %v190
    %v192 = vpop.f32.mrf.mxu0
    %193 = vmatprep.mubr.f32.mxu0 0.0
    %194 = vmatmul.mubr.f32.gmra.mxu0 %v77
    %v195 = vpop.f32.mrf.mxu0
    %v196 = vadd.f32 0.0, %v195
    %v197 = vpop.f32.mrf.mxu0
    %198 = vmatprep.mubr.f32.mxu0 0.0
    %199 = vmatmul.mubr.f32.gmra.mxu0 %v78
    %v200 = vpop.f32.mrf.mxu0
    %v201 = vadd.f32 0.0, %v200
    %v202 = vpop.f32.mrf.mxu0
    %203 = vmatprep.mubr.f32.mxu0 0.0
    %204 = vmatmul.mubr.f32.gmra.mxu0 %v79
    %v205 = vpop.f32.mrf.mxu0
    %v206 = vadd.f32 0.0, %v205
    %v207 = vpop.f32.mrf.mxu0
    %208 = vmatprep.mubr.f32.mxu0 0.0
    %209 = vmatmul.mubr.f32.gmra.mxu0 %v80
    %v210 = vpop.f32.mrf.mxu0
    %v211 = vadd.f32 0.0, %v210
    %v212 = vpop.f32.mrf.mxu0
    %213 = vmatprep.mubr.f32.mxu0 0.0
    %214 = vmatmul.mubr.f32.gmra.mxu0 %v81
    %v215 = vpop.f32.mrf.mxu0
    %v216 = vadd.f32 0.0, %v215
    %v217 = vpop.f32.mrf.mxu0
    %218 = vmatprep.mubr.f32.mxu0 0.0
    %219 = vmatmul.mubr.f32.gmra.mxu0 %v82
    %v220 = vpop.f32.mrf.mxu0
    %v221 = vadd.f32 0.0, %v220
    %v222 = vpop.f32.mrf.mxu0
    %223 = vmatprep.mubr.f32.mxu0 0.0
    %224 = vmatmul.mubr.f32.gmra.mxu0 %v83
    %v225 = vpop.f32.mrf.mxu0
    %v226 = vadd.f32 0.0, %v225
    %v227 = vpop.f32.mrf.mxu0
    %228 = vmatprep.mubr.f32.mxu0 0.0
    %229 = vmatmul.mubr.f32.gmra.mxu0 %v84
    %v230 = vpop.f32.mrf.mxu0
    %v231 = vadd.f32 0.0, %v230
    %v232 = vpop.f32.mrf.mxu0
    %233 = vmatprep.mubr.f32.mxu0 0.0
    %234 = vmatmul.mubr.f32.gmra.mxu0 %v85
    %v235 = vpop.f32.mrf.mxu0
    %v236 = vadd.f32 0.0, %v235
    %v237 = vpop.f32.mrf.mxu0
    %238 = vmatprep.mubr.f32.mxu0 0.0
    %239 = vmatmul.mubr.f32.gmra.mxu0 %v86
    %v240 = vpop.f32.mrf.mxu0
    %v241 = vadd.f32 0.0, %v240
    %v242 = vpop.f32.mrf.mxu0
    %243 = vmatprep.mubr.f32.mxu0 0.0
    %244 = vmatmul.mubr.f32.gmra.mxu0 %v87
    %v245 = vpop.f32.mrf.mxu0
    %v246 = vadd.f32 0.0, %v245
    %v247 = vpop.f32.mrf.mxu0
    %248 = vdwg.mxu0
    %v249 = vld [vmem:[%s2] sm:$0x1]
    %v251 = vlaneseq
    %v252 = vshrl.u32 %v251, 7
    %v253 = vsub.s32 0, %v252
    %v254 = vrot.slane %v249, %v253
    %v256 = vsub.f32 %v254, %v171
    %v257 = vsub.f32 %v254, %v176
    %v258 = vsub.f32 %v254, %v181
    %v259 = vsub.f32 %v254, %v186
    %v260 = vsub.f32 %v254, %v191
    %v261 = vsub.f32 %v254, %v196
    %v262 = vsub.f32 %v254, %v201
    %v263 = vsub.f32 %v254, %v206
    %v264 = vsub.f32 %v254, %v211
    %v265 = vsub.f32 %v254, %v216
    %v266 = vsub.f32 %v254, %v221
    %v267 = vsub.f32 %v254, %v226
    %v268 = vsub.f32 %v254, %v231
    %v269 = vsub.f32 %v254, %v236
    %v270 = vsub.f32 %v254, %v241
    %v271 = vsub.f32 %v254, %v246
    %v272 = vld [vmem:[%s3] sm:$0xff]
    %v273 = vld [vmem:[%s3 + $0x8] sm:$0xff]
    %v274 = vld [vmem:[%s3 + $0x10] sm:$0xff]
    %v275 = vld [vmem:[%s3 + $0x18] sm:$0xff]
    %v276 = vld [vmem:[%s3 + $0x20] sm:$0xff]
    %v277 = vld [vmem:[%s3 + $0x28] sm:$0xff]
    %v278 = vld [vmem:[%s3 + $0x30] sm:$0xff]
    %v279 = vld [vmem:[%s3 + $0x38] sm:$0xff]
    %v280 = vld [vmem:[%s3 + $0x40] sm:$0xff]
    %v281 = vld [vmem:[%s3 + $0x48] sm:$0xff]
    %v282 = vld [vmem:[%s3 + $0x50] sm:$0xff]
    %v283 = vld [vmem:[%s3 + $0x58] sm:$0xff]
    %v284 = vld [vmem:[%s3 + $0x60] sm:$0xff]
    %v285 = vld [vmem:[%s3 + $0x68] sm:$0xff]
    %v286 = vld [vmem:[%s3 + $0x70] sm:$0xff]
    %v287 = vld [vmem:[%s3 + $0x78] sm:$0xff]
    %v288 = vld [vmem:[%s4] sm:$0x1]
    %289 = vset.pattern.permute.xlu0 0
    %290 = vperm.xlu0 %289, %v272
    %v291 = vpop.permute.xlu0 %290
    %292 = vset.pattern.permute.xlu0 0
    %293 = vperm.xlu0 %292, %v273
    %v294 = vpop.permute.xlu0 %293
    %295 = vset.pattern.permute.xlu0 0
    %296 = vperm.xlu0 %295, %v274
    %v297 = vpop.permute.xlu0 %296
    %298 = vset.pattern.permute.xlu0 0
    %299 = vperm.xlu0 %298, %v275
    %v300 = vpop.permute.xlu0 %299
    %301 = vset.pattern.permute.xlu0 0
    %302 = vperm.xlu0 %301, %v276
    %v303 = vpop.permute.xlu0 %302
    %304 = vset.pattern.permute.xlu0 0
    %305 = vperm.xlu0 %304, %v277
    %v306 = vpop.permute.xlu0 %305
    %307 = vset.pattern.permute.xlu0 0
    %308 = vperm.xlu0 %307, %v278
    %v309 = vpop.permute.xlu0 %308
    %310 = vset.pattern.permute.xlu0 0
    %311 = vperm.xlu0 %310, %v279
    %v312 = vpop.permute.xlu0 %311
    %313 = vset.pattern.permute.xlu0 0
    %314 = vperm.xlu0 %313, %v280
    %v315 = vpop.permute.xlu0 %314
    %316 = vset.pattern.permute.xlu0 0
    %317 = vperm.xlu0 %316, %v281
    %v318 = vpop.permute.xlu0 %317
    %319 = vset.pattern.permute.xlu0 0
    %320 = vperm.xlu0 %319, %v282
    %v321 = vpop.permute.xlu0 %320
    %322 = vset.pattern.permute.xlu0 0
    %323 = vperm.xlu0 %322, %v283
    %v324 = vpop.permute.xlu0 %323
    %325 = vset.pattern.permute.xlu0 0
    %326 = vperm.xlu0 %325, %v284
    %v327 = vpop.permute.xlu0 %326
    %328 = vset.pattern.permute.xlu0 0
    %329 = vperm.xlu0 %328, %v285
    %v330 = vpop.permute.xlu0 %329
    %331 = vset.pattern.permute.xlu0 0
    %332 = vperm.xlu0 %331, %v286
    %v333 = vpop.permute.xlu0 %332
    %334 = vset.pattern.permute.xlu0 0
    %335 = vperm.xlu0 %334, %v287
    %v336 = vpop.permute.xlu0 %335
    %v337 = vlaneseq
    %v338 = vshrl.u32 %v337, 7
    %v339 = vsub.s32 0, %v338
    %v340 = vrot.slane %v288, %v339
    %vm341 = vcmp.eq.s32.totalorder %v291, %v340
    %vm342 = vcmp.eq.s32.totalorder %v294, %v340
    %vm343 = vcmp.eq.s32.totalorder %v297, %v340
    %vm344 = vcmp.eq.s32.totalorder %v300, %v340
    %vm345 = vcmp.eq.s32.totalorder %v303, %v340
    %vm346 = vcmp.eq.s32.totalorder %v306, %v340
    %vm347 = vcmp.eq.s32.totalorder %v309, %v340
    %vm348 = vcmp.eq.s32.totalorder %v312, %v340
    %vm349 = vcmp.eq.s32.totalorder %v315, %v340
    %vm350 = vcmp.eq.s32.totalorder %v318, %v340
    %vm351 = vcmp.eq.s32.totalorder %v321, %v340
    %vm352 = vcmp.eq.s32.totalorder %v324, %v340
    %vm353 = vcmp.eq.s32.totalorder %v327, %v340
    %vm354 = vcmp.eq.s32.totalorder %v330, %v340
    %vm355 = vcmp.eq.s32.totalorder %v333, %v340
    %vm356 = vcmp.eq.s32.totalorder %v336, %v340
    %v357 = vsel %vm341, %v256, -1e+30
    %v358 = vsel %vm342, %v257, -1e+30
    %v359 = vsel %vm343, %v258, -1e+30
    %v360 = vsel %vm344, %v259, -1e+30
    %v361 = vsel %vm345, %v260, -1e+30
    %v362 = vsel %vm346, %v261, -1e+30
    %v363 = vsel %vm347, %v262, -1e+30
    %v364 = vsel %vm348, %v263, -1e+30
    %v365 = vsel %vm349, %v264, -1e+30
    %v366 = vsel %vm350, %v265, -1e+30
    %v367 = vsel %vm351, %v266, -1e+30
    %v368 = vsel %vm352, %v267, -1e+30
    %v369 = vsel %vm353, %v268, -1e+30
    %v370 = vsel %vm354, %v269, -1e+30
    %v371 = vsel %vm355, %v270, -1e+30
    %v372 = vsel %vm356, %v271, -1e+30
    %v373 = vsel %vm341, 1e+30, %v256
    %v374 = vsel %vm342, 1e+30, %v257
    %v375 = vsel %vm343, 1e+30, %v258
    %v376 = vsel %vm344, 1e+30, %v259
    %v377 = vsel %vm345, 1e+30, %v260
    %v378 = vsel %vm346, 1e+30, %v261
    %v379 = vsel %vm347, 1e+30, %v262
    %v380 = vsel %vm348, 1e+30, %v263
    %v381 = vsel %vm349, 1e+30, %v264
    %v382 = vsel %vm350, 1e+30, %v265
    %v383 = vsel %vm351, 1e+30, %v266
    %v384 = vsel %vm352, 1e+30, %v267
    %v385 = vsel %vm353, 1e+30, %v268
    %v386 = vsel %vm354, 1e+30, %v269
    %v387 = vsel %vm355, 1e+30, %v270
    %v388 = vsel %vm356, 1e+30, %v271
    %v389 = vld [vmem:[#allocation2] sm:$0xff]
    %v390 = vld [vmem:[#allocation2 + $0x8] sm:$0xff]
    %v391 = vld [vmem:[#allocation2 + $0x10] sm:$0xff]
    %v392 = vld [vmem:[#allocation2 + $0x18] sm:$0xff]
    %v393 = vld [vmem:[#allocation2 + $0x20] sm:$0xff]
    %v394 = vld [vmem:[#allocation2 + $0x28] sm:$0xff]
    %v395 = vld [vmem:[#allocation2 + $0x30] sm:$0xff]
    %v396 = vld [vmem:[#allocation2 + $0x38] sm:$0xff]
    %v397 = vld [vmem:[#allocation2 + $0x40] sm:$0xff]
    %v398 = vld [vmem:[#allocation2 + $0x48] sm:$0xff]
    %v399 = vld [vmem:[#allocation2 + $0x50] sm:$0xff]
    %v400 = vld [vmem:[#allocation2 + $0x58] sm:$0xff]
    %v401 = vld [vmem:[#allocation2 + $0x60] sm:$0xff]
    %v402 = vld [vmem:[#allocation2 + $0x68] sm:$0xff]
    %v403 = vld [vmem:[#allocation2 + $0x70] sm:$0xff]
    %v404 = vld [vmem:[#allocation2 + $0x78] sm:$0xff]
    %v405 = vld [vmem:[#allocation3] sm:$0xff]
    %v406 = vld [vmem:[#allocation3 + $0x8] sm:$0xff]
    %v407 = vld [vmem:[#allocation3 + $0x10] sm:$0xff]
    %v408 = vld [vmem:[#allocation3 + $0x18] sm:$0xff]
    %v409 = vld [vmem:[#allocation3 + $0x20] sm:$0xff]
    %v410 = vld [vmem:[#allocation3 + $0x28] sm:$0xff]
    %v411 = vld [vmem:[#allocation3 + $0x30] sm:$0xff]
    %v412 = vld [vmem:[#allocation3 + $0x38] sm:$0xff]
    %v413 = vld [vmem:[#allocation3 + $0x40] sm:$0xff]
    %v414 = vld [vmem:[#allocation3 + $0x48] sm:$0xff]
    %v415 = vld [vmem:[#allocation3 + $0x50] sm:$0xff]
    %v416 = vld [vmem:[#allocation3 + $0x58] sm:$0xff]
    %v417 = vld [vmem:[#allocation3 + $0x60] sm:$0xff]
    %v418 = vld [vmem:[#allocation3 + $0x68] sm:$0xff]
    %v419 = vld [vmem:[#allocation3 + $0x70] sm:$0xff]
    %v420 = vld [vmem:[#allocation3 + $0x78] sm:$0xff]
    %v421 = vmax.f32 %v389, %v357
    %v422 = vmax.f32 %v390, %v358
    %v423 = vmax.f32 %v391, %v359
    %v424 = vmax.f32 %v392, %v360
    %v425 = vmax.f32 %v393, %v361
    %v426 = vmax.f32 %v394, %v362
    %v427 = vmax.f32 %v395, %v363
    %v428 = vmax.f32 %v396, %v364
    %v429 = vmax.f32 %v397, %v365
    %v430 = vmax.f32 %v398, %v366
    %v431 = vmax.f32 %v399, %v367
    %v432 = vmax.f32 %v400, %v368
    %v433 = vmax.f32 %v401, %v369
    %v434 = vmax.f32 %v402, %v370
    %v435 = vmax.f32 %v403, %v371
    %v436 = vmax.f32 %v404, %v372
    %v437 = vmin.f32 %v405, %v373
    %v438 = vmin.f32 %v406, %v374
    %v439 = vmin.f32 %v407, %v375
    %v440 = vmin.f32 %v408, %v376
    %v441 = vmin.f32 %v409, %v377
    %v442 = vmin.f32 %v410, %v378
    %v443 = vmin.f32 %v411, %v379
    %v444 = vmin.f32 %v412, %v380
    %v445 = vmin.f32 %v413, %v381
    %v446 = vmin.f32 %v414, %v382
    %v447 = vmin.f32 %v415, %v383
    %v448 = vmin.f32 %v416, %v384
    %v449 = vmin.f32 %v417, %v385
    %v450 = vmin.f32 %v418, %v386
    %v451 = vmin.f32 %v419, %v387
    %v452 = vmin.f32 %v420, %v388
    %453 = vst [vmem:[#allocation2] sm:$0xff] %v421
    %454 = vst [vmem:[#allocation2 + $0x8] sm:$0xff] %v422
    %455 = vst [vmem:[#allocation2 + $0x10] sm:$0xff] %v423
    %456 = vst [vmem:[#allocation2 + $0x18] sm:$0xff] %v424
    %457 = vst [vmem:[#allocation2 + $0x20] sm:$0xff] %v425
    %458 = vst [vmem:[#allocation2 + $0x28] sm:$0xff] %v426
    %459 = vst [vmem:[#allocation2 + $0x30] sm:$0xff] %v427
    %460 = vst [vmem:[#allocation2 + $0x38] sm:$0xff] %v428
    %461 = vst [vmem:[#allocation2 + $0x40] sm:$0xff] %v429
    %462 = vst [vmem:[#allocation2 + $0x48] sm:$0xff] %v430
    %463 = vst [vmem:[#allocation2 + $0x50] sm:$0xff] %v431
    %464 = vst [vmem:[#allocation2 + $0x58] sm:$0xff] %v432
    %465 = vst [vmem:[#allocation2 + $0x60] sm:$0xff] %v433
    %466 = vst [vmem:[#allocation2 + $0x68] sm:$0xff] %v434
    %467 = vst [vmem:[#allocation2 + $0x70] sm:$0xff] %v435
    %468 = vst [vmem:[#allocation2 + $0x78] sm:$0xff] %v436
    %469 = vst [vmem:[#allocation3] sm:$0xff] %v437
    %470 = vst [vmem:[#allocation3 + $0x8] sm:$0xff] %v438
    %471 = vst [vmem:[#allocation3 + $0x10] sm:$0xff] %v439
    %472 = vst [vmem:[#allocation3 + $0x18] sm:$0xff] %v440
    %473 = vst [vmem:[#allocation3 + $0x20] sm:$0xff] %v441
    %474 = vst [vmem:[#allocation3 + $0x28] sm:$0xff] %v442
    %475 = vst [vmem:[#allocation3 + $0x30] sm:$0xff] %v443
    %476 = vst [vmem:[#allocation3 + $0x38] sm:$0xff] %v444
    %477 = vst [vmem:[#allocation3 + $0x40] sm:$0xff] %v445
    %478 = vst [vmem:[#allocation3 + $0x48] sm:$0xff] %v446
    %479 = vst [vmem:[#allocation3 + $0x50] sm:$0xff] %v447
    %480 = vst [vmem:[#allocation3 + $0x58] sm:$0xff] %v448
    %481 = vst [vmem:[#allocation3 + $0x60] sm:$0xff] %v449
    %482 = vst [vmem:[#allocation3 + $0x68] sm:$0xff] %v450
    %483 = vst [vmem:[#allocation3 + $0x70] sm:$0xff] %v451
    %484 = vst [vmem:[#allocation3 + $0x78] sm:$0xff] %v452
    // Predicated region
    $region30: #{tpu_custom_call.1} parent=1 // pred_check
      %p485 = pneg %p36
    $region31: #{tpu_custom_call.1} parent=1 // pred_check_branch
      %487 = sbr.rel (%p485) target = $region33
    $region32: #{tpu_custom_call.1} parent=1 // pred_region
      %v488 = vld [vmem:[#allocation2] sm:$0xff]
      %v489 = vld [vmem:[#allocation2 + $0x8] sm:$0xff]
      %v490 = vld [vmem:[#allocation2 + $0x10] sm:$0xff]
      %v491 = vld [vmem:[#allocation2 + $0x18] sm:$0xff]
      %v492 = vld [vmem:[#allocation2 + $0x20] sm:$0xff]
      %v493 = vld [vmem:[#allocation2 + $0x28] sm:$0xff]
      %v494 = vld [vmem:[#allocation2 + $0x30] sm:$0xff]
      %v495 = vld [vmem:[#allocation2 + $0x38] sm:$0xff]
      %v496 = vld [vmem:[#allocation2 + $0x40] sm:$0xff]
      %v497 = vld [vmem:[#allocation2 + $0x48] sm:$0xff]
      %v498 = vld [vmem:[#allocation2 + $0x50] sm:$0xff]
      %v499 = vld [vmem:[#allocation2 + $0x58] sm:$0xff]
      %v500 = vld [vmem:[#allocation2 + $0x60] sm:$0xff]
      %v501 = vld [vmem:[#allocation2 + $0x68] sm:$0xff]
      %v502 = vld [vmem:[#allocation2 + $0x70] sm:$0xff]
      %v503 = vld [vmem:[#allocation2 + $0x78] sm:$0xff]
      %504 = vmax.xlane.f32.xlu0 %v488
      %v505 = vpop.xlane.xlu0 %504
      %506 = vmax.xlane.f32.xlu0 %v489
      %v507 = vpop.xlane.xlu0 %506
      %508 = vmax.xlane.f32.xlu0 %v490
      %v509 = vpop.xlane.xlu0 %508
      %510 = vmax.xlane.f32.xlu0 %v491
      %v511 = vpop.xlane.xlu0 %510
      %512 = vmax.xlane.f32.xlu0 %v492
      %v513 = vpop.xlane.xlu0 %512
      %514 = vmax.xlane.f32.xlu0 %v493
      %v515 = vpop.xlane.xlu0 %514
      %516 = vmax.xlane.f32.xlu0 %v494
      %v517 = vpop.xlane.xlu0 %516
      %518 = vmax.xlane.f32.xlu0 %v495
      %v519 = vpop.xlane.xlu0 %518
      %520 = vmax.xlane.f32.xlu0 %v496
      %v521 = vpop.xlane.xlu0 %520
      %522 = vmax.xlane.f32.xlu0 %v497
      %v523 = vpop.xlane.xlu0 %522
      %524 = vmax.xlane.f32.xlu0 %v498
      %v525 = vpop.xlane.xlu0 %524
      %526 = vmax.xlane.f32.xlu0 %v499
      %v527 = vpop.xlane.xlu0 %526
      %528 = vmax.xlane.f32.xlu0 %v500
      %v529 = vpop.xlane.xlu0 %528
      %530 = vmax.xlane.f32.xlu0 %v501
      %v531 = vpop.xlane.xlu0 %530
      %532 = vmax.xlane.f32.xlu0 %v502
      %v533 = vpop.xlane.xlu0 %532
      %534 = vmax.xlane.f32.xlu0 %v503
      %v535 = vpop.xlane.xlu0 %534
      %vm536 = vcmask 7168
      %537 = vst.msk [vmem:[%s5] sm:$0xff] %vm536, %v505
      %538 = vst.msk [vmem:[%s5 + $0x8] sm:$0xff] %vm536, %v507
      %539 = vst.msk [vmem:[%s5 + $0x10] sm:$0xff] %vm536, %v509
      %540 = vst.msk [vmem:[%s5 + $0x18] sm:$0xff] %vm536, %v511
      %541 = vst.msk [vmem:[%s5 + $0x20] sm:$0xff] %vm536, %v513
      %542 = vst.msk [vmem:[%s5 + $0x28] sm:$0xff] %vm536, %v515
      %543 = vst.msk [vmem:[%s5 + $0x30] sm:$0xff] %vm536, %v517
      %544 = vst.msk [vmem:[%s5 + $0x38] sm:$0xff] %vm536, %v519
      %545 = vst.msk [vmem:[%s5 + $0x40] sm:$0xff] %vm536, %v521
      %546 = vst.msk [vmem:[%s5 + $0x48] sm:$0xff] %vm536, %v523
      %547 = vst.msk [vmem:[%s5 + $0x50] sm:$0xff] %vm536, %v525
      %548 = vst.msk [vmem:[%s5 + $0x58] sm:$0xff] %vm536, %v527
      %549 = vst.msk [vmem:[%s5 + $0x60] sm:$0xff] %vm536, %v529
      %550 = vst.msk [vmem:[%s5 + $0x68] sm:$0xff] %vm536, %v531
      %551 = vst.msk [vmem:[%s5 + $0x70] sm:$0xff] %vm536, %v533
      %552 = vst.msk [vmem:[%s5 + $0x78] sm:$0xff] %vm536, %v535
      %v553 = vld [vmem:[#allocation3] sm:$0xff]
      %v554 = vld [vmem:[#allocation3 + $0x8] sm:$0xff]
      %v555 = vld [vmem:[#allocation3 + $0x10] sm:$0xff]
      %v556 = vld [vmem:[#allocation3 + $0x18] sm:$0xff]
      %v557 = vld [vmem:[#allocation3 + $0x20] sm:$0xff]
      %v558 = vld [vmem:[#allocation3 + $0x28] sm:$0xff]
      %v559 = vld [vmem:[#allocation3 + $0x30] sm:$0xff]
      %v560 = vld [vmem:[#allocation3 + $0x38] sm:$0xff]
      %v561 = vld [vmem:[#allocation3 + $0x40] sm:$0xff]
      %v562 = vld [vmem:[#allocation3 + $0x48] sm:$0xff]
      %v563 = vld [vmem:[#allocation3 + $0x50] sm:$0xff]
      %v564 = vld [vmem:[#allocation3 + $0x58] sm:$0xff]
      %v565 = vld [vmem:[#allocation3 + $0x60] sm:$0xff]
      %v566 = vld [vmem:[#allocation3 + $0x68] sm:$0xff]
      %v567 = vld [vmem:[#allocation3 + $0x70] sm:$0xff]
      %v568 = vld [vmem:[#allocation3 + $0x78] sm:$0xff]
      %569 = vmin.xlane.f32.xlu0 %v553
      %v570 = vpop.xlane.xlu0 %569
      %571 = vmin.xlane.f32.xlu0 %v554
      %v572 = vpop.xlane.xlu0 %571
      %573 = vmin.xlane.f32.xlu0 %v555
      %v574 = vpop.xlane.xlu0 %573
      %575 = vmin.xlane.f32.xlu0 %v556
      %v576 = vpop.xlane.xlu0 %575
      %577 = vmin.xlane.f32.xlu0 %v557
      %v578 = vpop.xlane.xlu0 %577
      %579 = vmin.xlane.f32.xlu0 %v558
      %v580 = vpop.xlane.xlu0 %579
      %581 = vmin.xlane.f32.xlu0 %v559
      %v582 = vpop.xlane.xlu0 %581
      %583 = vmin.xlane.f32.xlu0 %v560
      %v584 = vpop.xlane.xlu0 %583
      %585 = vmin.xlane.f32.xlu0 %v561
      %v586 = vpop.xlane.xlu0 %585
      %587 = vmin.xlane.f32.xlu0 %v562
      %v588 = vpop.xlane.xlu0 %587
      %589 = vmin.xlane.f32.xlu0 %v563
      %v590 = vpop.xlane.xlu0 %589
      %591 = vmin.xlane.f32.xlu0 %v564
      %v592 = vpop.xlane.xlu0 %591
      %593 = vmin.xlane.f32.xlu0 %v565
      %v594 = vpop.xlane.xlu0 %593
      %595 = vmin.xlane.f32.xlu0 %v566
      %v596 = vpop.xlane.xlu0 %595
      %597 = vmin.xlane.f32.xlu0 %v567
      %v598 = vpop.xlane.xlu0 %597
      %599 = vmin.xlane.f32.xlu0 %v568
      %v600 = vpop.xlane.xlu0 %599
      %601 = vst.msk [vmem:[%s6] sm:$0xff] %vm536, %v570
      %602 = vst.msk [vmem:[%s6 + $0x8] sm:$0xff] %vm536, %v572
      %603 = vst.msk [vmem:[%s6 + $0x10] sm:$0xff] %vm536, %v574
      %604 = vst.msk [vmem:[%s6 + $0x18] sm:$0xff] %vm536, %v576
      %605 = vst.msk [vmem:[%s6 + $0x20] sm:$0xff] %vm536, %v578
      %606 = vst.msk [vmem:[%s6 + $0x28] sm:$0xff] %vm536, %v580
      %607 = vst.msk [vmem:[%s6 + $0x30] sm:$0xff] %vm536, %v582
      %608 = vst.msk [vmem:[%s6 + $0x38] sm:$0xff] %vm536, %v584
      %609 = vst.msk [vmem:[%s6 + $0x40] sm:$0xff] %vm536, %v586
      %610 = vst.msk [vmem:[%s6 + $0x48] sm:$0xff] %vm536, %v588
      %611 = vst.msk [vmem:[%s6 + $0x50] sm:$0xff] %vm536, %v590
      %612 = vst.msk [vmem:[%s6 + $0x58] sm:$0xff] %vm536, %v592
      %613 = vst.msk [vmem:[%s6 + $0x60] sm:$0xff] %vm536, %v594
      %614 = vst.msk [vmem:[%s6 + $0x68] sm:$0xff] %vm536, %v596
      %615 = vst.msk [vmem:[%s6 + $0x70] sm:$0xff] %vm536, %v598
      %616 = vst.msk [vmem:[%s6 + $0x78] sm:$0xff] %vm536, %v600
    $region33: #{tpu_custom_call.1} parent=1 // pred_fallthru
      _
    // Predicated region
    $region34: #{tpu_custom_call.1} parent=1 // pred_check
      _
    $region35: #{tpu_custom_call.1} parent=1 // pred_check_branch
      %618 = sbr.rel (0) target = $region37
    $region36: #{tpu_custom_call.1} parent=1 // pred_region
      _
    $region37: #{tpu_custom_call.1} parent=1 // pred_fallthru
      _
    // Predicated region
    $region38: #{tpu_custom_call.1} parent=1 // pred_check
      _
    $region39: #{tpu_custom_call.1} parent=1 // pred_check_branch
      %620 = sbr.rel (0) target = $region41
    $region40: #{tpu_custom_call.1} parent=1 // pred_region
      _
    $region41: #{tpu_custom_call.1} parent=1 // pred_fallthru
      _
    // Predicated region
    $region42: #{tpu_custom_call.1} parent=1 // pred_check
      _
    $region43: #{tpu_custom_call.1} parent=1 // pred_check_branch
      %622 = sbr.rel (0) target = $region45
    $region44: #{tpu_custom_call.1} parent=1 // pred_region
      _
    $region45: #{tpu_custom_call.1} parent=1 // pred_fallthru
      _
    // Predicated region
    $region46: #{tpu_custom_call.1} parent=1 // pred_check
      _
    $region47: #{tpu_custom_call.1} parent=1 // pred_check_branch
      %624 = sbr.rel (0) target = $region49
    $region48: #{tpu_custom_call.1} parent=1 // pred_region
      _
    $region49: #{tpu_custom_call.1} parent=1 // pred_fallthru
      _
    %625 = vsyncpa [#allocation5], 1

</llo_original>
